<compile_context>
chip_gen: v6e
topology: v6e:2x2x1
jax: 0.10.0
libtpu: 0.0.40
codegen_flags: <defaults>
</compile_context>

<pallas_src>
import functools

import jax
import jax.numpy as jnp
from jax import lax
from jax.experimental import pallas as pl
from jax.experimental.pallas import tpu as pltpu


def _round_up(x, m):
    return ((x + m - 1) // m) * m


def _pick_tile(b_pad, block_b):
    """Largest batch tile (multiple of 128, <= block_b) that divides b_pad,
    keeping >= 2 grid steps when possible so both v7x TensorCores get work."""
    nb = b_pad // 128                      # number of 128-row groups (>=1)
    max_k = max(1, min(block_b // 128, nb))
    if nb >= 2:
        max_k = min(max_k, nb // 2)        # guarantee n_tiles >= 2
    k = max(d for d in range(1, max_k + 1) if nb % d == 0)
    return 128 * k


def rewardnet_kernel(x_ref, w1_ref, b1_ref, w2_ref, b2_ref, w3_ref, b3_ref,
                     o_ref, *, sub, n_sub):
    # Small resident operands (f32 epilogue constants).
    b1 = b1_ref[...]                             # (1, hidden) f32
    b2 = b2_ref[...]                             # (1, hidden) f32
    w3_row = w3_ref[...].astype(jnp.float32)     # (1, hidden)
    b3 = b3_ref[0, 0]                            # scalar from SMEM

    def body(c, carry):
        r = pl.multiple_of(c * sub, sub)
        xs = x_ref[pl.ds(r, sub), :]             # (sub, in_dim), compute dtype

        # fc1: MXU matmul (f32 accumulate), f32 bias + ReLU on the VPU.
        h1 = jnp.dot(xs, w1_ref[...], preferred_element_type=jnp.float32)
        h1 = jnp.maximum(h1 + b1, 0.0)

        # fc2: cast the operand back to the MXU compute dtype, f32 accumulate.
        h2 = jnp.dot(h1.astype(w2_ref.dtype), w2_ref[...],
                     preferred_element_type=jnp.float32)
        h2 = jnp.maximum(h2 + b2, 0.0)

        # fc3 (out_features=1): VPU multiply + XLU lane-reduce instead of an
        # N=1 MXU matmul; store as a lane-dense (1, sub) slice of the output row.
        out = jnp.sum(h2 * w3_row, axis=-1) + b3          # (sub,)
        o_ref[:, pl.ds(r, sub)] = out[None, :].astype(o_ref.dtype)
        return carry

    lax.fori_loop(0, n_sub, body, None, unroll=True)


def reward_net_forward(state, action, params, *, block_b=2048,
                       compute_dtype=jnp.bfloat16):
    """state: [B, state_nums], action: [B, action_nums] -> [B, 1] float32."""
    w1, b1, w2, b2, w3, b3 = params
    B = state.shape[0]
    in_dim = state.shape[1] + action.shape[1]
    hidden = w1.shape[1]
    assert w1.shape[0] == in_dim and w3.shape == (hidden, 1)

    # Fuse the torch.cat + fc1 split into one K=in_dim matmul operand; the
    # concat + pad + cast fuse into a single wrapper-side XLA op.
    x = jnp.concatenate([state, action], axis=1)
    b_pad = _round_up(B, 128)                  # pad to 128 only, never to tb
    if b_pad != B:
        x = jnp.pad(x, ((0, b_pad - B), (0, 0)))
    x = x.astype(compute_dtype)

    tb = _pick_tile(b_pad, block_b)            # divides b_pad exactly
    n_tiles = b_pad // tb
    sub = 128                                  # in-register sub-chunk rows
    n_sub = tb // sub

    # MXU operands in compute_dtype (bf16 recommended); epilogue stays f32.
    w1c = w1.astype(compute_dtype)
    w2c = w2.astype(compute_dtype)
    w3c = w3.reshape(1, hidden).astype(compute_dtype)
    b1c = b1.reshape(1, hidden).astype(jnp.float32)
    b2c = b2.reshape(1, hidden).astype(jnp.float32)
    b3c = b3.reshape(1, 1).astype(jnp.float32)

    def resident(shape):   # weights/biases: same block every grid step
        return pl.BlockSpec(shape, lambda i: (0, 0))

    kernel = functools.partial(rewardnet_kernel, sub=sub, n_sub=n_sub)

    out = pl.pallas_call(
        kernel,
        out_shape=jax.ShapeDtypeStruct((1, b_pad), jnp.float32),
        grid_spec=pltpu.PrefetchScalarGridSpec(
            num_scalar_prefetch=0,
            grid=(n_tiles,),
            in_specs=[
                pl.BlockSpec((tb, in_dim), lambda i: (i, 0)),        # x tile
                resident((in_dim, hidden)),                          # W1
                resident((1, hidden)),                               # b1
                resident((hidden, hidden)),                          # W2
                resident((1, hidden)),                               # b2
                resident((1, hidden)),                               # w3 row
                pl.BlockSpec(memory_space=pltpu.MemorySpace.SMEM),   # b3 scalar
            ],
            out_specs=pl.BlockSpec((1, tb), lambda i: (0, i)),       # lane-dense
        ),
        compiler_params=pltpu.CompilerParams(
            dimension_semantics=("parallel",),        # batch axis across v7x TCs
            vmem_limit_bytes=32 * 1024 * 1024,
        ),
    )(x, w1c, b1c, w2c, b2c, w3c, b3c)

    # (1, B_pad) lane-dense slab -> [B, 1]; padded tail rows dropped.
    return out.reshape(b_pad, 1)[:B]


def init_params(key, state_nums, action_nums, hidden=128):
    """Deterministic init mimicking nn.Linear default (U[-1/sqrt(fan_in), +])."""
    def linear(key, fan_in, fan_out):
        kw, kb = jax.random.split(key)
        bound = 1.0 / jnp.sqrt(fan_in)
        w = jax.random.uniform(kw, (fan_in, fan_out), jnp.float32, -bound, bound)
        b = jax.random.uniform(kb, (1, fan_out), jnp.float32, -bound, bound)
        return w, b

    k1, k2, k3 = jax.random.split(key, 3)
    w1, b1 = linear(k1, state_nums + action_nums, hidden)
    w2, b2 = linear(k2, hidden, hidden)
    w3, b3 = linear(k3, hidden, 1)
    return (w1, b1, w2, b2, w3, b3)


def reference_forward(state, action, params, precision=None):
    w1, b1, w2, b2, w3, b3 = params
    x = jnp.concatenate([state, action], axis=1)
    h = jax.nn.relu(jnp.dot(x, w1, precision=precision) + b1)
    h = jax.nn.relu(jnp.dot(h, w2, precision=precision) + b2)
    return jnp.dot(h, w3, precision=precision) + b3


if __name__ == "__main__":
    key = jax.random.PRNGKey(0)
    k_params, k_state, k_action = jax.random.split(key, 3)

    batch = 8
    state_nums = 16
    action_nums = 16

    params = init_params(k_params, state_nums, action_nums)
    state = jax.random.normal(k_state, (batch, state_nums), jnp.float32)
    action = jax.random.normal(k_action, (batch, action_nums), jnp.float32)

    ref = reference_forward(state, action, params,
                            precision=jax.lax.Precision.HIGHEST)

    # Default bf16-MXU / f32-accumulate path.
    out_bf16 = jax.block_until_ready(reward_net_forward(state, action, params))
    assert out_bf16.shape == (batch, 1)
    assert jnp.allclose(out_bf16, ref, atol=1e-1, rtol=1e-1)

    # Full-f32 path (tolerance loosened vs HIGHEST-precision reference since
    # Mosaic's f32 matmul decomposition is not bit-identical to XLA's).
    out_f32 = jax.block_until_ready(
        reward_net_forward(state, action, params, compute_dtype=jnp.float32))
    assert out_f32.shape == (batch, 1)
    assert jnp.allclose(out_f32, ref, atol=1e-3, rtol=1e-3)

    # Exercise padding + multi-tile grid (B=200 -> b_pad=256, two 128-row tiles).
    b2 = 200
    k_s2, k_a2 = jax.random.split(jax.random.PRNGKey(1))
    s2 = jax.random.normal(k_s2, (b2, state_nums), jnp.float32)
    a2 = jax.random.normal(k_a2, (b2, action_nums), jnp.float32)
    ref2 = reference_forward(s2, a2, params, precision=jax.lax.Precision.HIGHEST)
    out2 = jax.block_until_ready(reward_net_forward(s2, a2, params))
    assert out2.shape == (b2, 1)
    assert jnp.allclose(out2, ref2, atol=1e-1, rtol=1e-1)

    print("KERNEL_OK")
</pallas_src>

<mosaic_0001>
module attributes {stable_mosaic.version = 11 : i64} {
  func.func @rewardnet_kernel(%arg0: i32, %arg1: memref<128x32xbf16, #tpu.memory_space<vmem>>, %arg2: memref<32x128xbf16, #tpu.memory_space<vmem>>, %arg3: memref<1x128xf32, #tpu.memory_space<vmem>>, %arg4: memref<128x128xbf16, #tpu.memory_space<vmem>>, %arg5: memref<1x128xf32, #tpu.memory_space<vmem>>, %arg6: memref<1x128xbf16, #tpu.memory_space<vmem>>, %arg7: memref<1x1xf32, #tpu.memory_space<smem>>, %arg8: memref<1x128xf32, #tpu.memory_space<vmem>>) attributes {dimension_semantics = [#tpu.dimension_semantics<parallel>], iteration_bounds = array<i64: 1>, scalar_prefetch = 0 : i64, scratch_operands = 0 : i64, tpu.core_type = #tpu.core_type<tc>, window_params = [{transform_indices = @transform_0, window_bounds = array<i64: 128, 32>}, {pipeline_mode = #tpu.pipeline_mode<synchronous>, transform_indices = @transform_1, window_bounds = array<i64: 32, 128>}, {pipeline_mode = #tpu.pipeline_mode<synchronous>, transform_indices = @transform_2, window_bounds = array<i64: 1, 128>}, {pipeline_mode = #tpu.pipeline_mode<synchronous>, transform_indices = @transform_3, window_bounds = array<i64: 128, 128>}, {pipeline_mode = #tpu.pipeline_mode<synchronous>, transform_indices = @transform_4, window_bounds = array<i64: 1, 128>}, {pipeline_mode = #tpu.pipeline_mode<synchronous>, transform_indices = @transform_5, window_bounds = array<i64: 1, 128>}, {transform_indices = @transform_6, window_bounds = array<i64: 1, 1>}, {transform_indices = @transform_7, window_bounds = array<i64: 1, 128>}]} {
    %c0 = arith.constant 0 : index
    %c0_0 = arith.constant 0 : index
    %0 = vector.load %arg3[%c0, %c0_0] : memref<1x128xf32, #tpu.memory_space<vmem>>, vector<1x128xf32>
    %c0_1 = arith.constant 0 : index
    %c0_2 = arith.constant 0 : index
    %1 = vector.load %arg5[%c0_1, %c0_2] : memref<1x128xf32, #tpu.memory_space<vmem>>, vector<1x128xf32>
    %c0_3 = arith.constant 0 : index
    %c0_4 = arith.constant 0 : index
    %2 = vector.load %arg6[%c0_3, %c0_4] : memref<1x128xbf16, #tpu.memory_space<vmem>>, vector<1x128xbf16>
    %3 = arith.extf %2 : vector<1x128xbf16> to vector<1x128xf32>
    %c0_5 = arith.constant 0 : index
    %c0_6 = arith.constant 0 : index
    %4 = memref.load %arg7[%c0_5, %c0_6] : memref<1x1xf32, #tpu.memory_space<smem>>
    %c0_i32 = arith.constant 0 : i32
    %c128_i32 = arith.constant 128 : i32
    %5 = arith.muli %c0_i32, %c128_i32 : i32
    %6 = tpu.assume_multiple %5, 128 : i32
    %7 = arith.index_cast %6 : i32 to index
    %c0_7 = arith.constant 0 : index
    %8 = vector.load %arg1[%7, %c0_7] : memref<128x32xbf16, #tpu.memory_space<vmem>>, vector<128x32xbf16>
    %c0_8 = arith.constant 0 : index
    %c0_9 = arith.constant 0 : index
    %9 = vector.load %arg2[%c0_8, %c0_9] : memref<32x128xbf16, #tpu.memory_space<vmem>>, vector<32x128xbf16>
    %cst = arith.constant dense<0.000000e+00> : vector<128x128xf32>
    %10 = tpu.matmul %8, %9, %cst {dimension_numbers = #tpu.dot_dimension_numbers<[1], [0], [0], [1], [0, 0, 1, 1], [], []>} : vector<128x32xbf16>, vector<32x128xbf16>, vector<128x128xf32> -> vector<128x128xf32>
    %11 = vector.broadcast %0 : vector<1x128xf32> to vector<128x128xf32>
    %12 = arith.addf %10, %11 : vector<128x128xf32>
    %cst_10 = arith.constant 0.000000e+00 : f32
    %13 = vector.broadcast %cst_10 : f32 to vector<128x128xf32>
    %14 = arith.maximumf %12, %13 : vector<128x128xf32>
    %15 = arith.truncf %14 : vector<128x128xf32> to vector<128x128xbf16>
    %c0_11 = arith.constant 0 : index
    %c0_12 = arith.constant 0 : index
    %16 = vector.load %arg4[%c0_11, %c0_12] : memref<128x128xbf16, #tpu.memory_space<vmem>>, vector<128x128xbf16>
    %cst_13 = arith.constant dense<0.000000e+00> : vector<128x128xf32>
    %17 = tpu.matmul %15, %16, %cst_13 {dimension_numbers = #tpu.dot_dimension_numbers<[1], [0], [0], [1], [0, 0, 1, 1], [], []>} : vector<128x128xbf16>, vector<128x128xbf16>, vector<128x128xf32> -> vector<128x128xf32>
    %18 = vector.broadcast %1 : vector<1x128xf32> to vector<128x128xf32>
    %19 = arith.addf %17, %18 : vector<128x128xf32>
    %cst_14 = arith.constant 0.000000e+00 : f32
    %20 = vector.broadcast %cst_14 : f32 to vector<128x128xf32>
    %21 = arith.maximumf %19, %20 : vector<128x128xf32>
    %22 = vector.broadcast %3 : vector<1x128xf32> to vector<128x128xf32>
    %23 = arith.mulf %21, %22 : vector<128x128xf32>
    %cst_15 = arith.constant dense<0.000000e+00> : vector<128xf32>
    %24 = vector.multi_reduction <add>, %23, %cst_15 [1] : vector<128x128xf32> to vector<128xf32>
    %25 = vector.broadcast %4 : f32 to vector<128xf32>
    %26 = arith.addf %24, %25 : vector<128xf32>
    %27 = vector.shape_cast %26 : vector<128xf32> to vector<1x128xf32>
    %c0_16 = arith.constant 0 : index
    %28 = arith.index_cast %6 : i32 to index
    %29 = vector.load %arg8[%c0_16, %28] : memref<1x128xf32, #tpu.memory_space<vmem>>, vector<1x128xf32>
    tpu.vector_store %arg8[%c0_16, %28], %27 {strides = array<i32>} : memref<1x128xf32, #tpu.memory_space<vmem>>, vector<1x128xf32>,
    %c1_i32 = arith.constant 1 : i32
    return
  }
  func.func @transform_0(%arg0: i32) -> (i32, i32) {
    %c0_i32 = arith.constant 0 : i32
    %c0_i32_0 = arith.constant 0 : i32
    return %arg0, %c0_i32 : i32, i32
  }
  func.func @transform_1(%arg0: i32) -> (i32, i32) {
    %c0_i32 = arith.constant 0 : i32
    %c0_i32_0 = arith.constant 0 : i32
    %c0_i32_1 = arith.constant 0 : i32
    return %c0_i32, %c0_i32_0 : i32, i32
  }
  func.func @transform_2(%arg0: i32) -> (i32, i32) {
    %c0_i32 = arith.constant 0 : i32
    %c0_i32_0 = arith.constant 0 : i32
    %c0_i32_1 = arith.constant 0 : i32
    return %c0_i32, %c0_i32_0 : i32, i32
  }
  func.func @transform_3(%arg0: i32) -> (i32, i32) {
    %c0_i32 = arith.constant 0 : i32
    %c0_i32_0 = arith.constant 0 : i32
    %c0_i32_1 = arith.constant 0 : i32
    return %c0_i32, %c0_i32_0 : i32, i32
  }
  func.func @transform_4(%arg0: i32) -> (i32, i32) {
    %c0_i32 = arith.constant 0 : i32
    %c0_i32_0 = arith.constant 0 : i32
    %c0_i32_1 = arith.constant 0 : i32
    return %c0_i32, %c0_i32_0 : i32, i32
  }
  func.func @transform_5(%arg0: i32) -> (i32, i32) {
    %c0_i32 = arith.constant 0 : i32
    %c0_i32_0 = arith.constant 0 : i32
    %c0_i32_1 = arith.constant 0 : i32
    return %c0_i32, %c0_i32_0 : i32, i32
  }
  func.func @transform_6(%arg0: i32) -> (i32, i32) {
    %c0_i32 = arith.constant 0 : i32
    %c0_i32_0 = arith.constant 0 : i32
    %c0_i32_1 = arith.constant 0 : i32
    return %c0_i32, %c0_i32_0 : i32, i32
  }
  func.func @transform_7(%arg0: i32) -> (i32, i32) {
    %c0_i32 = arith.constant 0 : i32
    %c0_i32_0 = arith.constant 0 : i32
    return %c0_i32, %arg0 : i32, i32
  }
}

</mosaic_0001>

<llo_original>
// kernel: tpu_custom_call.1
$region0: #{tpu_custom_call.1}
  #allocation0 [shape = 'u32[]', space=smem, size = 0x4, offset = 0x4, fixed_abs, tag = 'smem constant byte address 0x4 - core index']
  #allocation1 [shape = 'u32[144,128]{1,0:T(1,128)}', space=vmem, size = 0x12000, scoped, tag = 'internal scratch']
  #allocation2 [shape = 'f32[1,1]{1,0:T(1,128)S(6)}', space=smem, size = 0x200, scoped, tag = 'scoped memory for tpu_custom_call.1']
  %s0 = inlined_call_operand.vmem [shape: bf16[128,32], index: 0, kind: input, shape index: {}]
  %s1 = inlined_call_operand.vmem [shape: bf16[32,128], index: 1, kind: input, shape index: {}]
  %s2 = inlined_call_operand.vmem [shape: f32[1,128], index: 2, kind: input, shape index: {}]
  %s3 = inlined_call_operand.vmem [shape: bf16[128,128], index: 3, kind: input, shape index: {}]
  %s4 = inlined_call_operand.vmem [shape: f32[1,128], index: 4, kind: input, shape index: {}]
  %s5 = inlined_call_operand.vmem [shape: bf16[1,128], index: 5, kind: input, shape index: {}]
  %s6 = inlined_call_operand.<no memory space> [shape: f32[1,1], index: 6, kind: input, shape index: {}]
  %s7 = inlined_call_operand.hbm [shape: f32[1,128], index: 7, kind: output, shape index: {}]
  %s8 = sld [smem:[#allocation0]]
  $region38: #{tpu_custom_call.1} parent=0
    _
  %s10 = ssub.s32 1, %s8
  %s11 = scalar_select 0, %s10, %s8
  %12 = sst [smem:[#allocation2]] %s6
  $region1: #{tpu_custom_call.1} parent=0
    #allocation3 [shape = 'u8[512]{0}', space=vmem, size = 0x400, scoped, tag = 'output window, operand 0, single buffered']
    #allocation4 [shape = 's32[1]{0}', space=sflag, size = 0x4, scoped, tag = 'scoped memory for tpu_custom_call.1']
    %13 = vsyncpa [#allocation4], 0
    // Predicated region
    $region2: #{tpu_custom_call.1} parent=1 // pred_check
      _
    $region3: #{tpu_custom_call.1} parent=1 // pred_check_branch
      %15 = sbr.rel (0) target = $region5
    $region4: #{tpu_custom_call.1} parent=1 // pred_region
      _
    $region5: #{tpu_custom_call.1} parent=1 // pred_fallthru
      _
    // Predicated region
    $region6: #{tpu_custom_call.1} parent=1 // pred_check
      _
    $region7: #{tpu_custom_call.1} parent=1 // pred_check_branch
      %17 = sbr.rel (0) target = $region9
    $region8: #{tpu_custom_call.1} parent=1 // pred_region
      _
    $region9: #{tpu_custom_call.1} parent=1 // pred_fallthru
      _
    // Predicated region
    $region10: #{tpu_custom_call.1} parent=1 // pred_check
      _
    $region11: #{tpu_custom_call.1} parent=1 // pred_check_branch
      %19 = sbr.rel (0) target = $region13
    $region12: #{tpu_custom_call.1} parent=1 // pred_region
      _
    $region13: #{tpu_custom_call.1} parent=1 // pred_fallthru
      _
    // Predicated region
    $region14: #{tpu_custom_call.1} parent=1 // pred_check
      _
    $region15: #{tpu_custom_call.1} parent=1 // pred_check_branch
      %21 = sbr.rel (0) target = $region17
    $region16: #{tpu_custom_call.1} parent=1 // pred_region
      _
    $region17: #{tpu_custom_call.1} parent=1 // pred_fallthru
      _
    // Predicated region
    $region18: #{tpu_custom_call.1} parent=1 // pred_check
      _
    $region19: #{tpu_custom_call.1} parent=1 // pred_check_branch
      %23 = sbr.rel (0) target = $region21
    $region20: #{tpu_custom_call.1} parent=1 // pred_region
      _
    $region21: #{tpu_custom_call.1} parent=1 // pred_fallthru
      _
    // Predicated region
    $region22: #{tpu_custom_call.1} parent=1 // pred_check
      _
    $region23: #{tpu_custom_call.1} parent=1 // pred_check_branch
      %25 = sbr.rel (0) target = $region25
    $region24: #{tpu_custom_call.1} parent=1 // pred_region
      _
    $region25: #{tpu_custom_call.1} parent=1 // pred_fallthru
      _
    // Predicated region
    $region26: #{tpu_custom_call.1} parent=1 // pred_check
      _
    $region27: #{tpu_custom_call.1} parent=1 // pred_check_branch
      %27 = sbr.rel (0) target = $region29
    $region28: #{tpu_custom_call.1} parent=1 // pred_region
      _
    $region29: #{tpu_custom_call.1} parent=1 // pred_fallthru
      _
    %v29 = vld [vmem:[%s2] sm:$0x1]
    %v30 = vld [vmem:[%s4] sm:$0x1]
    %v31 = vld [vmem:[%s5] sm:$0x1]
    %v32 = vunpack.c.l.bf16 %v31
    %s33 = sld [smem:[#allocation2]]
    %v34 = vld [vmem:[%s0] sm:$0xf]
    %v35 = vld [vmem:[%s0 + $0x4] sm:$0xf]
    %v36 = vld [vmem:[%s0 + $0x8] sm:$0xf]
    %v37 = vld [vmem:[%s0 + $0xc] sm:$0xf]
    %v38 = vld [vmem:[%s0 + $0x10] sm:$0xf]
    %v39 = vld [vmem:[%s0 + $0x14] sm:$0xf]
    %v40 = vld [vmem:[%s0 + $0x18] sm:$0xf]
    %v41 = vld [vmem:[%s0 + $0x1c] sm:$0xf]
    %v42 = vld [vmem:[%s0 + $0x20] sm:$0xf]
    %v43 = vld [vmem:[%s0 + $0x24] sm:$0xf]
    %v44 = vld [vmem:[%s0 + $0x28] sm:$0xf]
    %v45 = vld [vmem:[%s0 + $0x2c] sm:$0xf]
    %v46 = vld [vmem:[%s0 + $0x30] sm:$0xf]
    %v47 = vld [vmem:[%s0 + $0x34] sm:$0xf]
    %v48 = vld [vmem:[%s0 + $0x38] sm:$0xf]
    %v49 = vld [vmem:[%s0 + $0x3c] sm:$0xf]
    %v50 = vld [vmem:[%s1] sm:$0xf]
    %v51 = vld [vmem:[%s1 + $0x4] sm:$0xf]
    %v52 = vld [vmem:[%s1 + $0x8] sm:$0xf]
    %v53 = vld [vmem:[%s1 + $0xc] sm:$0xf]
    %v55 = vlaneseq
    %v56 = vshrl.u32 %v55, 7
    %v57 = vsub.s32 0, %v56
    %v58 = vrot.slane %v29, %v57
    %v76 = vunpack.c.l.b16 %v34
    %v77 = vunpack.c.l.b16 %v35
    %v78 = vunpack.c.l.b16 %v36
    %v79 = vunpack.c.l.b16 %v37
    %v80 = vunpack.c.l.b16 %v38
    %v81 = vunpack.c.l.b16 %v39
    %v82 = vunpack.c.l.b16 %v40
    %v83 = vunpack.c.l.b16 %v41
    %v84 = vunpack.c.l.b16 %v42
    %v85 = vunpack.c.l.b16 %v43
    %v86 = vunpack.c.l.b16 %v44
    %v87 = vunpack.c.l.b16 %v45
    %v88 = vunpack.c.l.b16 %v46
    %v89 = vunpack.c.l.b16 %v47
    %v90 = vunpack.c.l.b16 %v48
    %v91 = vunpack.c.l.b16 %v49
    %v92 = vpack.c.b16 %v77, %v76
    %v93 = vpack.c.b16 %v79, %v78
    %v94 = vpack.c.b16 %v81, %v80
    %v95 = vpack.c.b16 %v83, %v82
    %v96 = vpack.c.b16 %v85, %v84
    %v97 = vpack.c.b16 %v87, %v86
    %v98 = vpack.c.b16 %v89, %v88
    %v99 = vpack.c.b16 %v91, %v90
    %v104 = vunpack.c.l.b16 %v50
    %v105 = vunpack.c.l.b16 %v51
    %v106 = vunpack.c.l.b16 %v52
    %v107 = vunpack.c.l.b16 %v53
    %v108 = vpack.c.b16 %v105, %v104
    %v109 = vpack.c.b16 %v107, %v106
    %vm112 = vcmask 261120
    %v114 = vsel %vm112, %v92, 0
    %v117 = vsel %vm112, %v93, 0
    %v120 = vsel %vm112, %v94, 0
    %v123 = vsel %vm112, %v95, 0
    %v126 = vsel %vm112, %v96, 0
    %v129 = vsel %vm112, %v97, 0
    %v132 = vsel %vm112, %v98, 0
    %v135 = vsel %vm112, %v99, 0
    %137 = vmatprep.subr.bf16.mxu0 0
    %138 = vmatpush1.bf16.msra.mxu0 0
    %139 = vmatprep.subr.bf16.mxu0 0
    %140 = vmatpush1.bf16.msra.mxu0 0
    %141 = vmatprep.subr.bf16.mxu0 0
    %142 = vmatpush1.bf16.msra.mxu0 0
    %143 = vmatprep.subr.bf16.mxu0 0
    %144 = vmatpush1.bf16.msra.mxu0 0
    %145 = vmatprep.subr.bf16.mxu0 0
    %146 = vmatpush1.bf16.msra.mxu0 0
    %147 = vmatprep.subr.bf16.mxu0 0
    %148 = vmatpush1.bf16.msra.mxu0 0
    %149 = vmatprep.subr.bf16.mxu0 0
    %150 = vmatpush1.bf16.msra.mxu0 %v109
    %151 = vmatprep.subr.bf16.mxu0 0
    %152 = vmatpush1.bf16.msra.mxu0 %v108
    %153 = vmatprep.subr.bf16.mxu0 0
    %154 = vmatpush2.bf16.msra.mxu0 0
    %155 = vmatprep.subr.bf16.mxu0 0
    %156 = vmatpush2.bf16.msra.mxu0 0
    %157 = vmatprep.subr.bf16.mxu0 0
    %158 = vmatpush2.bf16.msra.mxu0 0
    %159 = vmatprep.subr.bf16.mxu0 0
    %160 = vmatpush2.bf16.msra.mxu0 0
    %161 = vmatprep.subr.bf16.mxu0 0
    %162 = vmatpush2.bf16.msra.mxu0 0
    %163 = vmatprep.subr.bf16.mxu0 0
    %164 = vmatpush2.bf16.msra.mxu0 0
    %165 = vmatprep.subr.bf16.mxu0 0
    %166 = vmatpush2.bf16.msra.mxu0 0
    %167 = vmatprep.subr.bf16.mxu0 0
    %168 = vmatpush2.bf16.msra.mxu0 0
    %169 = vmatprep.mubr.bf16.mxu0 0
    %170 = vmatmul.mubr.bf16.gmra.mxu0 %v114
    %v171 = vpop.f32.mrf.mxu0
    %v172 = vadd.f32 %v58, %v171
    %v173 = vpop.f32.mrf.mxu0
    %v174 = vpop.f32.mrf.mxu0
    %v175 = vadd.f32 %v58, %v174
    %v176 = vpop.f32.mrf.mxu0
    %177 = vmatprep.mubr.bf16.mxu0 0
    %178 = vmatmul.mubr.bf16.gmra.mxu0 %v117
    %v179 = vpop.f32.mrf.mxu0
    %v180 = vadd.f32 %v58, %v179
    %v181 = vpop.f32.mrf.mxu0
    %v182 = vpop.f32.mrf.mxu0
    %v183 = vadd.f32 %v58, %v182
    %v184 = vpop.f32.mrf.mxu0
    %185 = vmatprep.mubr.bf16.mxu0 0
    %186 = vmatmul.mubr.bf16.gmra.mxu0 %v120
    %v187 = vpop.f32.mrf.mxu0
    %v188 = vadd.f32 %v58, %v187
    %v189 = vpop.f32.mrf.mxu0
    %v190 = vpop.f32.mrf.mxu0
    %v191 = vadd.f32 %v58, %v190
    %v192 = vpop.f32.mrf.mxu0
    %193 = vmatprep.mubr.bf16.mxu0 0
    %194 = vmatmul.mubr.bf16.gmra.mxu0 %v123
    %v195 = vpop.f32.mrf.mxu0
    %v196 = vadd.f32 %v58, %v195
    %v197 = vpop.f32.mrf.mxu0
    %v198 = vpop.f32.mrf.mxu0
    %v199 = vadd.f32 %v58, %v198
    %v200 = vpop.f32.mrf.mxu0
    %201 = vmatprep.mubr.bf16.mxu0 0
    %202 = vmatmul.mubr.bf16.gmra.mxu0 %v126
    %v203 = vpop.f32.mrf.mxu0
    %v204 = vadd.f32 %v58, %v203
    %v205 = vpop.f32.mrf.mxu0
    %v206 = vpop.f32.mrf.mxu0
    %v207 = vadd.f32 %v58, %v206
    %v208 = vpop.f32.mrf.mxu0
    %209 = vmatprep.mubr.bf16.mxu0 0
    %210 = vmatmul.mubr.bf16.gmra.mxu0 %v129
    %v211 = vpop.f32.mrf.mxu0
    %v212 = vadd.f32 %v58, %v211
    %v213 = vpop.f32.mrf.mxu0
    %v214 = vpop.f32.mrf.mxu0
    %v215 = vadd.f32 %v58, %v214
    %v216 = vpop.f32.mrf.mxu0
    %217 = vmatprep.mubr.bf16.mxu0 0
    %218 = vmatmul.mubr.bf16.gmra.mxu0 %v132
    %v219 = vpop.f32.mrf.mxu0
    %v220 = vadd.f32 %v58, %v219
    %v221 = vpop.f32.mrf.mxu0
    %v222 = vpop.f32.mrf.mxu0
    %v223 = vadd.f32 %v58, %v222
    %v224 = vpop.f32.mrf.mxu0
    %225 = vmatprep.mubr.bf16.mxu0 0
    %226 = vmatmul.mubr.bf16.gmra.mxu0 %v135
    %v227 = vpop.f32.mrf.mxu0
    %v228 = vadd.f32 %v58, %v227
    %v229 = vpop.f32.mrf.mxu0
    %v230 = vpop.f32.mrf.mxu0
    %v231 = vadd.f32 %v58, %v230
    %v232 = vpop.f32.mrf.mxu0
    %233 = vdwg.mxu0
    %v234 = vmax.f32 %v172, 0.0
    %v235 = vmax.f32 %v175, 0.0
    %v236 = vmax.f32 %v180, 0.0
    %v237 = vmax.f32 %v183, 0.0
    %v238 = vmax.f32 %v188, 0.0
    %v239 = vmax.f32 %v191, 0.0
    %v240 = vmax.f32 %v196, 0.0
    %v241 = vmax.f32 %v199, 0.0
    %v242 = vmax.f32 %v204, 0.0
    %v243 = vmax.f32 %v207, 0.0
    %v244 = vmax.f32 %v212, 0.0
    %v245 = vmax.f32 %v215, 0.0
    %v246 = vmax.f32 %v220, 0.0
    %v247 = vmax.f32 %v223, 0.0
    %v248 = vmax.f32 %v228, 0.0
    %v249 = vmax.f32 %v231, 0.0
    %v250 = vpack.c.bf16 %v235, %v234
    %v251 = vpack.c.bf16 %v237, %v236
    %v252 = vpack.c.bf16 %v239, %v238
    %v253 = vpack.c.bf16 %v241, %v240
    %v254 = vpack.c.bf16 %v243, %v242
    %v255 = vpack.c.bf16 %v245, %v244
    %v256 = vpack.c.bf16 %v247, %v246
    %v257 = vpack.c.bf16 %v249, %v248
    %v258 = vld [vmem:[%s3] sm:$0xf]
    %v259 = vld [vmem:[%s3 + $0x4] sm:$0xf]
    %v260 = vld [vmem:[%s3 + $0x8] sm:$0xf]
    %v261 = vld [vmem:[%s3 + $0xc] sm:$0xf]
    %v262 = vld [vmem:[%s3 + $0x10] sm:$0xf]
    %v263 = vld [vmem:[%s3 + $0x14] sm:$0xf]
    %v264 = vld [vmem:[%s3 + $0x18] sm:$0xf]
    %v265 = vld [vmem:[%s3 + $0x1c] sm:$0xf]
    %v266 = vld [vmem:[%s3 + $0x20] sm:$0xf]
    %v267 = vld [vmem:[%s3 + $0x24] sm:$0xf]
    %v268 = vld [vmem:[%s3 + $0x28] sm:$0xf]
    %v269 = vld [vmem:[%s3 + $0x2c] sm:$0xf]
    %v270 = vld [vmem:[%s3 + $0x30] sm:$0xf]
    %v271 = vld [vmem:[%s3 + $0x34] sm:$0xf]
    %v272 = vld [vmem:[%s3 + $0x38] sm:$0xf]
    %v273 = vld [vmem:[%s3 + $0x3c] sm:$0xf]
    %v275 = vlaneseq
    %v276 = vshrl.u32 %v275, 7
    %v277 = vsub.s32 0, %v276
    %v278 = vrot.slane %v30, %v277
    %v296 = vunpack.c.l.b16 %v258
    %v297 = vunpack.c.l.b16 %v259
    %v298 = vunpack.c.l.b16 %v260
    %v299 = vunpack.c.l.b16 %v261
    %v300 = vunpack.c.l.b16 %v262
    %v301 = vunpack.c.l.b16 %v263
    %v302 = vunpack.c.l.b16 %v264
    %v303 = vunpack.c.l.b16 %v265
    %v304 = vunpack.c.l.b16 %v266
    %v305 = vunpack.c.l.b16 %v267
    %v306 = vunpack.c.l.b16 %v268
    %v307 = vunpack.c.l.b16 %v269
    %v308 = vunpack.c.l.b16 %v270
    %v309 = vunpack.c.l.b16 %v271
    %v310 = vunpack.c.l.b16 %v272
    %v311 = vunpack.c.l.b16 %v273
    %v312 = vpack.c.b16 %v297, %v296
    %v313 = vpack.c.b16 %v299, %v298
    %v314 = vpack.c.b16 %v301, %v300
    %v315 = vpack.c.b16 %v303, %v302
    %v316 = vpack.c.b16 %v305, %v304
    %v317 = vpack.c.b16 %v307, %v306
    %v318 = vpack.c.b16 %v309, %v308
    %v319 = vpack.c.b16 %v311, %v310
    %328 = vmatprep.subr.bf16.mxu0 0
    %329 = vmatpush1.bf16.msra.mxu0 %v319
    %330 = vmatprep.subr.bf16.mxu0 0
    %331 = vmatpush1.bf16.msra.mxu0 %v318
    %332 = vmatprep.subr.bf16.mxu0 0
    %333 = vmatpush1.bf16.msra.mxu0 %v317
    %334 = vmatprep.subr.bf16.mxu0 0
    %335 = vmatpush1.bf16.msra.mxu0 %v316
    %336 = vmatprep.subr.bf16.mxu0 0
    %337 = vmatpush1.bf16.msra.mxu0 %v315
    %338 = vmatprep.subr.bf16.mxu0 0
    %339 = vmatpush1.bf16.msra.mxu0 %v314
    %340 = vmatprep.subr.bf16.mxu0 0
    %341 = vmatpush1.bf16.msra.mxu0 %v313
    %342 = vmatprep.subr.bf16.mxu0 0
    %343 = vmatpush1.bf16.msra.mxu0 %v312
    %344 = vmatprep.subr.bf16.mxu0 0
    %345 = vmatpush2.bf16.msra.mxu0 0
    %346 = vmatprep.subr.bf16.mxu0 0
    %347 = vmatpush2.bf16.msra.mxu0 0
    %348 = vmatprep.subr.bf16.mxu0 0
    %349 = vmatpush2.bf16.msra.mxu0 0
    %350 = vmatprep.subr.bf16.mxu0 0
    %351 = vmatpush2.bf16.msra.mxu0 0
    %352 = vmatprep.subr.bf16.mxu0 0
    %353 = vmatpush2.bf16.msra.mxu0 0
    %354 = vmatprep.subr.bf16.mxu0 0
    %355 = vmatpush2.bf16.msra.mxu0 0
    %356 = vmatprep.subr.bf16.mxu0 0
    %357 = vmatpush2.bf16.msra.mxu0 0
    %358 = vmatprep.subr.bf16.mxu0 0
    %359 = vmatpush2.bf16.msra.mxu0 0
    %360 = vmatprep.mubr.bf16.mxu0 0
    %361 = vmatmul.mubr.bf16.gmra.mxu0 %v250
    %v362 = vpop.f32.mrf.mxu0
    %v363 = vadd.f32 %v278, %v362
    %v364 = vpop.f32.mrf.mxu0
    %v365 = vpop.f32.mrf.mxu0
    %v366 = vadd.f32 %v278, %v365
    %v367 = vpop.f32.mrf.mxu0
    %368 = vmatprep.mubr.bf16.mxu0 0
    %369 = vmatmul.mubr.bf16.gmra.mxu0 %v251
    %v370 = vpop.f32.mrf.mxu0
    %v371 = vadd.f32 %v278, %v370
    %v372 = vpop.f32.mrf.mxu0
    %v373 = vpop.f32.mrf.mxu0
    %v374 = vadd.f32 %v278, %v373
    %v375 = vpop.f32.mrf.mxu0
    %376 = vmatprep.mubr.bf16.mxu0 0
    %377 = vmatmul.mubr.bf16.gmra.mxu0 %v252
    %v378 = vpop.f32.mrf.mxu0
    %v379 = vadd.f32 %v278, %v378
    %v380 = vpop.f32.mrf.mxu0
    %v381 = vpop.f32.mrf.mxu0
    %v382 = vadd.f32 %v278, %v381
    %v383 = vpop.f32.mrf.mxu0
    %384 = vmatprep.mubr.bf16.mxu0 0
    %385 = vmatmul.mubr.bf16.gmra.mxu0 %v253
    %v386 = vpop.f32.mrf.mxu0
    %v387 = vadd.f32 %v278, %v386
    %v388 = vpop.f32.mrf.mxu0
    %v389 = vpop.f32.mrf.mxu0
    %v390 = vadd.f32 %v278, %v389
    %v391 = vpop.f32.mrf.mxu0
    %392 = vmatprep.mubr.bf16.mxu0 0
    %393 = vmatmul.mubr.bf16.gmra.mxu0 %v254
    %v394 = vpop.f32.mrf.mxu0
    %v395 = vadd.f32 %v278, %v394
    %v396 = vpop.f32.mrf.mxu0
    %v397 = vpop.f32.mrf.mxu0
    %v398 = vadd.f32 %v278, %v397
    %v399 = vpop.f32.mrf.mxu0
    %400 = vmatprep.mubr.bf16.mxu0 0
    %401 = vmatmul.mubr.bf16.gmra.mxu0 %v255
    %v402 = vpop.f32.mrf.mxu0
    %v403 = vadd.f32 %v278, %v402
    %v404 = vpop.f32.mrf.mxu0
    %v405 = vpop.f32.mrf.mxu0
    %v406 = vadd.f32 %v278, %v405
    %v407 = vpop.f32.mrf.mxu0
    %408 = vmatprep.mubr.bf16.mxu0 0
    %409 = vmatmul.mubr.bf16.gmra.mxu0 %v256
    %v410 = vpop.f32.mrf.mxu0
    %v411 = vadd.f32 %v278, %v410
    %v412 = vpop.f32.mrf.mxu0
    %v413 = vpop.f32.mrf.mxu0
    %v414 = vadd.f32 %v278, %v413
    %v415 = vpop.f32.mrf.mxu0
    %416 = vmatprep.mubr.bf16.mxu0 0
    %417 = vmatmul.mubr.bf16.gmra.mxu0 %v257
    %v418 = vpop.f32.mrf.mxu0
    %v419 = vadd.f32 %v278, %v418
    %v420 = vpop.f32.mrf.mxu0
    %v421 = vpop.f32.mrf.mxu0
    %v422 = vadd.f32 %v278, %v421
    %v423 = vpop.f32.mrf.mxu0
    %424 = vdwg.mxu0
    %v425 = vmax.f32 %v363, 0.0
    %v426 = vmax.f32 %v366, 0.0
    %v427 = vmax.f32 %v371, 0.0
    %v428 = vmax.f32 %v374, 0.0
    %v429 = vmax.f32 %v379, 0.0
    %v430 = vmax.f32 %v382, 0.0
    %v431 = vmax.f32 %v387, 0.0
    %v432 = vmax.f32 %v390, 0.0
    %v433 = vmax.f32 %v395, 0.0
    %v434 = vmax.f32 %v398, 0.0
    %v435 = vmax.f32 %v403, 0.0
    %v436 = vmax.f32 %v406, 0.0
    %v437 = vmax.f32 %v411, 0.0
    %v438 = vmax.f32 %v414, 0.0
    %v439 = vmax.f32 %v419, 0.0
    %v440 = vmax.f32 %v422, 0.0
    %v441 = vlaneseq
    %v442 = vshrl.u32 %v441, 7
    %v443 = vsub.s32 0, %v442
    %v444 = vrot.slane %v32, %v443
    %v445 = vmul.f32 %v425, %v444
    %v446 = vmul.f32 %v426, %v444
    %v447 = vmul.f32 %v427, %v444
    %v448 = vmul.f32 %v428, %v444
    %v449 = vmul.f32 %v429, %v444
    %v450 = vmul.f32 %v430, %v444
    %v451 = vmul.f32 %v431, %v444
    %v452 = vmul.f32 %v432, %v444
    %v453 = vmul.f32 %v433, %v444
    %v454 = vmul.f32 %v434, %v444
    %v455 = vmul.f32 %v435, %v444
    %v456 = vmul.f32 %v436, %v444
    %v457 = vmul.f32 %v437, %v444
    %v458 = vmul.f32 %v438, %v444
    %v459 = vmul.f32 %v439, %v444
    %v460 = vmul.f32 %v440, %v444
    %461 = vadd.xlane.f32.xlu0 %v445
    %v462 = vpop.xlane.xlu0 %461
    %463 = vadd.xlane.f32.xlu0 %v446
    %v464 = vpop.xlane.xlu0 %463
    %465 = vadd.xlane.f32.xlu0 %v447
    %v466 = vpop.xlane.xlu0 %465
    %467 = vadd.xlane.f32.xlu0 %v448
    %v468 = vpop.xlane.xlu0 %467
    %469 = vadd.xlane.f32.xlu0 %v449
    %v470 = vpop.xlane.xlu0 %469
    %471 = vadd.xlane.f32.xlu0 %v450
    %v472 = vpop.xlane.xlu0 %471
    %473 = vadd.xlane.f32.xlu0 %v451
    %v474 = vpop.xlane.xlu0 %473
    %475 = vadd.xlane.f32.xlu0 %v452
    %v476 = vpop.xlane.xlu0 %475
    %477 = vadd.xlane.f32.xlu0 %v453
    %v478 = vpop.xlane.xlu0 %477
    %479 = vadd.xlane.f32.xlu0 %v454
    %v480 = vpop.xlane.xlu0 %479
    %481 = vadd.xlane.f32.xlu0 %v455
    %v482 = vpop.xlane.xlu0 %481
    %483 = vadd.xlane.f32.xlu0 %v456
    %v484 = vpop.xlane.xlu0 %483
    %485 = vadd.xlane.f32.xlu0 %v457
    %v486 = vpop.xlane.xlu0 %485
    %487 = vadd.xlane.f32.xlu0 %v458
    %v488 = vpop.xlane.xlu0 %487
    %489 = vadd.xlane.f32.xlu0 %v459
    %v490 = vpop.xlane.xlu0 %489
    %491 = vadd.xlane.f32.xlu0 %v460
    %v492 = vpop.xlane.xlu0 %491
    %v493 = vstv %s33
    %v494 = vadd.f32 %v462, %v493
    %v495 = vadd.f32 %v464, %v493
    %v496 = vadd.f32 %v466, %v493
    %v497 = vadd.f32 %v468, %v493
    %v498 = vadd.f32 %v470, %v493
    %v499 = vadd.f32 %v472, %v493
    %v500 = vadd.f32 %v474, %v493
    %v501 = vadd.f32 %v476, %v493
    %v502 = vadd.f32 %v478, %v493
    %v503 = vadd.f32 %v480, %v493
    %v504 = vadd.f32 %v482, %v493
    %v505 = vadd.f32 %v484, %v493
    %v506 = vadd.f32 %v486, %v493
    %v507 = vadd.f32 %v488, %v493
    %v508 = vadd.f32 %v490, %v493
    %v509 = vadd.f32 %v492, %v493
    %v526 = vlaneseq
    %v527 = vand.u32 %v526, 127
    %v528 = vlaneseq
    %v529 = vshrl.u32 %v528, 7
    %v530 = vsub.s32 %v527, %v529
    %v531 = vrot.slane %v494, %v530
    %v532 = vadd.s32 %v527, 4294967288
    %v533 = vlaneseq
    %v534 = vshrl.u32 %v533, 7
    %v535 = vsub.s32 %v532, %v534
    %v536 = vrot.slane %v495, %v535
    %vm537 = vcmask 130112
    %v538 = vsel %vm537, %v536, %v531
    %v539 = vadd.s32 %v527, 4294967280
    %v540 = vlaneseq
    %v541 = vshrl.u32 %v540, 7
    %v542 = vsub.s32 %v539, %v541
    %v543 = vrot.slane %v496, %v542
    %vm544 = vcmask 195712
    %v545 = vsel %vm544, %v543, %v538
    %v546 = vadd.s32 %v527, 4294967272
    %v547 = vlaneseq
    %v548 = vshrl.u32 %v547, 7
    %v549 = vsub.s32 %v546, %v548
    %v550 = vrot.slane %v497, %v549
    %vm551 = vcmask 261312
    %v552 = vsel %vm551, %v550, %v545
    %v553 = vadd.s32 %v527, 4294967264
    %v554 = vlaneseq
    %v555 = vshrl.u32 %v554, 7
    %v556 = vsub.s32 %v553, %v555
    %v557 = vrot.slane %v498, %v556
    %vm558 = vcmask 326912
    %v559 = vsel %vm558, %v557, %v552
    %v560 = vadd.s32 %v527, 4294967256
    %v561 = vlaneseq
    %v562 = vshrl.u32 %v561, 7
    %v563 = vsub.s32 %v560, %v562
    %v564 = vrot.slane %v499, %v563
    %vm565 = vcmask 392512
    %v566 = vsel %vm565, %v564, %v559
    %v567 = vadd.s32 %v527, 4294967248
    %v568 = vlaneseq
    %v569 = vshrl.u32 %v568, 7
    %v570 = vsub.s32 %v567, %v569
    %v571 = vrot.slane %v500, %v570
    %vm572 = vcmask 458112
    %v573 = vsel %vm572, %v571, %v566
    %v574 = vadd.s32 %v527, 4294967240
    %v575 = vlaneseq
    %v576 = vshrl.u32 %v575, 7
    %v577 = vsub.s32 %v574, %v576
    %v578 = vrot.slane %v501, %v577
    %vm579 = vcmask 523712
    %v580 = vsel %vm579, %v578, %v573
    %v581 = vadd.s32 %v527, 4294967232
    %v582 = vlaneseq
    %v583 = vshrl.u32 %v582, 7
    %v584 = vsub.s32 %v581, %v583
    %v585 = vrot.slane %v502, %v584
    %vm586 = vcmask 589312
    %v587 = vsel %vm586, %v585, %v580
    %v588 = vadd.s32 %v527, 4294967224
    %v589 = vlaneseq
    %v590 = vshrl.u32 %v589, 7
    %v591 = vsub.s32 %v588, %v590
    %v592 = vrot.slane %v503, %v591
    %vm593 = vcmask 654912
    %v594 = vsel %vm593, %v592, %v587
    %v595 = vadd.s32 %v527, 4294967216
    %v596 = vlaneseq
    %v597 = vshrl.u32 %v596, 7
    %v598 = vsub.s32 %v595, %v597
    %v599 = vrot.slane %v504, %v598
    %vm600 = vcmask 720512
    %v601 = vsel %vm600, %v599, %v594
    %v602 = vadd.s32 %v527, 4294967208
    %v603 = vlaneseq
    %v604 = vshrl.u32 %v603, 7
    %v605 = vsub.s32 %v602, %v604
    %v606 = vrot.slane %v505, %v605
    %vm607 = vcmask 786112
    %v608 = vsel %vm607, %v606, %v601
    %v609 = vadd.s32 %v527, 4294967200
    %v610 = vlaneseq
    %v611 = vshrl.u32 %v610, 7
    %v612 = vsub.s32 %v609, %v611
    %v613 = vrot.slane %v506, %v612
    %vm614 = vcmask 851712
    %v615 = vsel %vm614, %v613, %v608
    %v616 = vadd.s32 %v527, 4294967192
    %v617 = vlaneseq
    %v618 = vshrl.u32 %v617, 7
    %v619 = vsub.s32 %v616, %v618
    %v620 = vrot.slane %v507, %v619
    %vm621 = vcmask 917312
    %v622 = vsel %vm621, %v620, %v615
    %v623 = vadd.s32 %v527, 4294967184
    %v624 = vlaneseq
    %v625 = vshrl.u32 %v624, 7
    %v626 = vsub.s32 %v623, %v625
    %v627 = vrot.slane %v508, %v626
    %vm628 = vcmask 982912
    %v629 = vsel %vm628, %v627, %v622
    %v630 = vadd.s32 %v527, 4294967176
    %v631 = vlaneseq
    %v632 = vshrl.u32 %v631, 7
    %v633 = vsub.s32 %v630, %v632
    %v634 = vrot.slane %v509, %v633
    %vm635 = vcmask 1048512
    %v636 = vsel %vm635, %v634, %v629
    %638 = vst [vmem:[#allocation3] sm:$0x1] %v636
    // Predicated region
    $region30: #{tpu_custom_call.1} parent=1 // pred_check
      _
    $region31: #{tpu_custom_call.1} parent=1 // pred_check_branch
      %640 = sbr.rel (0) target = $region33
    $region32: #{tpu_custom_call.1} parent=1 // pred_region
      %s642 = ssub.s32 16, 16
      %643 = vsyncadd [#allocation4], %s642
      %s645 = sshll.u32 [#allocation3], 4
      %s646 = int_to_ptr.vmem [resolvable:$true] %s645
      %648 = dma.vmem_to_hbm [thread:$0]  %s646, 16, %s7, [#allocation4]
    $region33: #{tpu_custom_call.1} parent=1 // pred_fallthru
      _
    // Predicated region
    $region34: #{tpu_custom_call.1} parent=1 // pred_check
      _
    $region35: #{tpu_custom_call.1} parent=1 // pred_check_branch
      %650 = sbr.rel (0) target = $region37
    $region36: #{tpu_custom_call.1} parent=1 // pred_region
      %651 = dma.done [#allocation4], 16
    $region37: #{tpu_custom_call.1} parent=1 // pred_fallthru
      _
    %652 = vsyncpa [#allocation4], 1

</llo_original>
